<compile_context>
chip_gen: v7x
topology: tpu7x:2x2x1
jax: 0.10.0
libtpu: 0.0.40
codegen_flags: <defaults>
</compile_context>

<pallas_src>
import functools

import jax
import jax.numpy as jnp
from jax import lax
from jax.experimental import pallas as pl
from jax.experimental.pallas import tpu as pltpu

LN_EPS = 1e-5  # nn.LayerNorm default


def _round_up(n, m):
    return ((n + m - 1) // m) * m


# -----------------------------------------------------------------------------
# Kernel
# -----------------------------------------------------------------------------
def dqn_kernel(x_ref,
               w1_ref, b1_ref, g1_ref, be1_ref,
               w2_ref, b2_ref, g2_ref, be2_ref,
               w3_ref, b3_ref,
               o_ref,
               *, hidden_dim):
    """Full DQN forward for one (TB, feat) batch tile, entirely in VMEM."""
    inv_h = jnp.float32(1.0 / hidden_dim)  # real (unpadded) LN width
    mm_dtype = w1_ref.dtype                # f32 or bf16 (MXU operands only)

    def layernorm(h, gamma, beta):
        # Single-pass stats. Padded hidden lanes of h are exactly zero
        # (zero weight columns + zero bias), so lane sums over the padded
        # width equal sums over the real width; divide by the real hidden_dim.
        mu = jnp.sum(h, axis=-1, keepdims=True) * inv_h
        ms = jnp.sum(h * h, axis=-1, keepdims=True) * inv_h
        var = ms - mu * mu
        return (h - mu) * lax.rsqrt(var + LN_EPS) * gamma + beta

    x = x_ref[...]  # already f32; no redundant cast

    # Layer 1: Linear -> LayerNorm -> ReLU
    h = jnp.dot(x.astype(mm_dtype), w1_ref[...],
                preferred_element_type=jnp.float32) + b1_ref[...]
    h = jnp.maximum(layernorm(h, g1_ref[...], be1_ref[...]), 0.0)

    # Layer 2: Linear -> LayerNorm -> ReLU
    h = jnp.dot(h.astype(mm_dtype), w2_ref[...],
                preferred_element_type=jnp.float32) + b2_ref[...]
    h = jnp.maximum(layernorm(h, g2_ref[...], be2_ref[...]), 0.0)

    # Output head: Linear (+ Identity).  Lane width is 128-padded -> dense vst.
    out = jnp.dot(h.astype(mm_dtype), w3_ref[...],
                  preferred_element_type=jnp.float32) + b3_ref[...]
    o_ref[...] = out.astype(o_ref.dtype)


# -----------------------------------------------------------------------------
# Params
# -----------------------------------------------------------------------------
def init_dqn_params(key, state_dim, action_dim, hidden_dim):
    """nn.Linear-style U(-1/sqrt(fan_in), 1/sqrt(fan_in)); LayerNorm gamma=1, beta=0."""
    def linear(k, fan_in, fan_out):
        kw, kb = jax.random.split(k)
        bound = 1.0 / jnp.sqrt(fan_in)
        w = jax.random.uniform(kw, (fan_in, fan_out), jnp.float32, -bound, bound)
        b = jax.random.uniform(kb, (1, fan_out), jnp.float32, -bound, bound)
        return w, b

    k1, k2, k3 = jax.random.split(key, 3)
    w1, b1 = linear(k1, state_dim, hidden_dim)
    w2, b2 = linear(k2, hidden_dim, hidden_dim)
    w3, b3 = linear(k3, hidden_dim, action_dim)
    return dict(w1=w1, b1=b1, g1=jnp.ones((1, hidden_dim), jnp.float32),
                be1=jnp.zeros((1, hidden_dim), jnp.float32),
                w2=w2, b2=b2, g2=jnp.ones((1, hidden_dim), jnp.float32),
                be2=jnp.zeros((1, hidden_dim), jnp.float32),
                w3=w3, b3=b3)


def pad_dqn_params(params, *, matmul_dtype=jnp.float32):
    """Zero-pad every feature dim to a multiple of 128 (lane-dense), done once
    at init time.  Padded hidden columns carry gamma=beta=0 so they stay
    exactly zero through LN/ReLU and feed zero rows of the next weight; padded
    output columns are sliced off in the wrapper.  Weights optionally cast to
    bf16 (MXU operands); biases / LN params stay f32."""
    s, h = params["w1"].shape
    a = params["w3"].shape[1]
    sp, hp, ap = _round_up(s, 128), _round_up(h, 128), _round_up(a, 128)

    def pad2(x, r, c):
        return jnp.pad(x, ((0, r - x.shape[0]), (0, c - x.shape[1])))

    padded = dict(
        w1=pad2(params["w1"], sp, hp).astype(matmul_dtype),
        b1=pad2(params["b1"], 1, hp),
        g1=pad2(params["g1"], 1, hp),
        be1=pad2(params["be1"], 1, hp),
        w2=pad2(params["w2"], hp, hp).astype(matmul_dtype),
        b2=pad2(params["b2"], 1, hp),
        g2=pad2(params["g2"], 1, hp),
        be2=pad2(params["be2"], 1, hp),
        w3=pad2(params["w3"], hp, ap).astype(matmul_dtype),
        b3=pad2(params["b3"], 1, ap),
    )
    return padded, (sp, hp, ap)


# -----------------------------------------------------------------------------
# Wrapper
# -----------------------------------------------------------------------------
@functools.partial(jax.jit, static_argnames=("action_dim", "hidden_dim", "block_batch"))
def dqn_forward(states, padded_params, *, action_dim, hidden_dim, block_batch=256):
    batch, state_dim = states.shape
    p = padded_params
    sp, hp = p["w1"].shape
    ap = p["w3"].shape[1]

    # Batch tile: multiple of 8 sublanes; cap at block_batch to bound the
    # per-tile VMEM footprint (activation + output double-buffers + resident
    # weights stay far below the 32 MiB scoped default on all generations).
    tb = min(block_batch, _round_up(batch, 8))
    padded_batch = _round_up(batch, tb)

    # Zero-pad batch rows and feature lanes; zero feature columns hit zero
    # weight rows, so the result is exact.
    x = jnp.pad(states.astype(jnp.float32),
                ((0, padded_batch - batch), (0, sp - state_dim)))

    kernel = functools.partial(dqn_kernel, hidden_dim=hidden_dim)

    def resident(shape):  # weights / LN params: same block every grid step
        return pl.BlockSpec(shape, lambda i: (0, 0))

    out = pl.pallas_call(
        kernel,
        out_shape=jax.ShapeDtypeStruct((padded_batch, ap), jnp.float32),
        grid=(padded_batch // tb,),
        in_specs=[
            pl.BlockSpec((tb, sp), lambda i: (i, 0)),      # x: pipelined tile
            resident((sp, hp)), resident((1, hp)), resident((1, hp)), resident((1, hp)),
            resident((hp, hp)), resident((1, hp)), resident((1, hp)), resident((1, hp)),
            resident((hp, ap)), resident((1, ap)),
        ],
        out_specs=pl.BlockSpec((tb, ap), lambda i: (i, 0)),
        compiler_params=pltpu.CompilerParams(
            dimension_semantics=("parallel",)),            # megacore on v7x
    )(x,
      p["w1"], p["b1"], p["g1"], p["be1"],
      p["w2"], p["b2"], p["g2"], p["be2"],
      p["w3"], p["b3"])

    return out[:batch, :action_dim]


# -----------------------------------------------------------------------------
# Pure-JAX reference (mirrors the PyTorch module)
# -----------------------------------------------------------------------------
def dqn_reference(states, params, mm_dtype=jnp.float32):
    def mm(a, w):
        return jnp.dot(a.astype(mm_dtype), w.astype(mm_dtype),
                       preferred_element_type=jnp.float32)

    def ln(h, gamma, beta):
        mu = jnp.mean(h, axis=-1, keepdims=True)
        var = jnp.mean(jnp.square(h - mu), axis=-1, keepdims=True)
        return (h - mu) * lax.rsqrt(var + LN_EPS) * gamma + beta

    h = mm(states, params["w1"]) + params["b1"]
    h = jnp.maximum(ln(h, params["g1"], params["be1"]), 0.0)
    h = mm(h, params["w2"]) + params["b2"]
    h = jnp.maximum(ln(h, params["g2"], params["be2"]), 0.0)
    return mm(h, params["w3"]) + params["b3"]


if __name__ == "__main__":
    # Small shapes consistent with the module's forward (use_pooling=False).
    batch, state_dim, action_dim, hidden_dim = 64, 16, 8, 128

    key = jax.random.PRNGKey(0)
    k_params, k_x = jax.random.split(key)
    params = init_dqn_params(k_params, state_dim, action_dim, hidden_dim)
    states = jax.random.normal(k_x, (batch, state_dim), jnp.float32)

    # --- f32 matmul path (matches PyTorch f32 semantics) -------------------
    padded_f32, _ = pad_dqn_params(params, matmul_dtype=jnp.float32)
    out = dqn_forward(states, padded_f32, action_dim=action_dim,
                      hidden_dim=hidden_dim, block_batch=32)
    out = jax.block_until_ready(out)
    ref = dqn_reference(states, params)
    assert out.shape == (batch, action_dim)
    assert jnp.allclose(out, ref, atol=1e-3, rtol=1e-3), "f32 mismatch vs reference"

    # --- bf16 MXU-operand path (v6e/v7x fast path, f32 LN/ReLU) -------------
    padded_bf16, _ = pad_dqn_params(params, matmul_dtype=jnp.bfloat16)
    out_bf16 = dqn_forward(states, padded_bf16, action_dim=action_dim,
                           hidden_dim=hidden_dim, block_batch=32)
    out_bf16 = jax.block_until_ready(out_bf16)
    ref_bf16 = dqn_reference(states, params, mm_dtype=jnp.bfloat16)
    assert jnp.allclose(out_bf16, ref_bf16, atol=5e-3, rtol=5e-3), "bf16 mismatch"

    print("KERNEL_OK")
</pallas_src>

<mosaic_0001>
module attributes {stable_mosaic.version = 11 : i64} {
  func.func @dqn_kernel(%arg0: i32, %arg1: memref<32x128xf32, #tpu.memory_space<vmem>>, %arg2: memref<128x128xf32, #tpu.memory_space<vmem>>, %arg3: memref<1x128xf32, #tpu.memory_space<vmem>>, %arg4: memref<1x128xf32, #tpu.memory_space<vmem>>, %arg5: memref<1x128xf32, #tpu.memory_space<vmem>>, %arg6: memref<128x128xf32, #tpu.memory_space<vmem>>, %arg7: memref<1x128xf32, #tpu.memory_space<vmem>>, %arg8: memref<1x128xf32, #tpu.memory_space<vmem>>, %arg9: memref<1x128xf32, #tpu.memory_space<vmem>>, %arg10: memref<128x128xf32, #tpu.memory_space<vmem>>, %arg11: memref<1x128xf32, #tpu.memory_space<vmem>>, %arg12: memref<32x128xf32, #tpu.memory_space<vmem>>) attributes {dimension_semantics = [#tpu.dimension_semantics<parallel>], iteration_bounds = array<i64: 2>, scalar_prefetch = 0 : i64, scratch_operands = 0 : i64, tpu.core_type = #tpu.core_type<tc>, window_params = [{transform_indices = @transform_0, window_bounds = array<i64: 32, 128>}, {pipeline_mode = #tpu.pipeline_mode<synchronous>, transform_indices = @transform_1, window_bounds = array<i64: 128, 128>}, {pipeline_mode = #tpu.pipeline_mode<synchronous>, transform_indices = @transform_2, window_bounds = array<i64: 1, 128>}, {pipeline_mode = #tpu.pipeline_mode<synchronous>, transform_indices = @transform_3, window_bounds = array<i64: 1, 128>}, {pipeline_mode = #tpu.pipeline_mode<synchronous>, transform_indices = @transform_4, window_bounds = array<i64: 1, 128>}, {pipeline_mode = #tpu.pipeline_mode<synchronous>, transform_indices = @transform_5, window_bounds = array<i64: 128, 128>}, {pipeline_mode = #tpu.pipeline_mode<synchronous>, transform_indices = @transform_6, window_bounds = array<i64: 1, 128>}, {pipeline_mode = #tpu.pipeline_mode<synchronous>, transform_indices = @transform_7, window_bounds = array<i64: 1, 128>}, {pipeline_mode = #tpu.pipeline_mode<synchronous>, transform_indices = @transform_8, window_bounds = array<i64: 1, 128>}, {pipeline_mode = #tpu.pipeline_mode<synchronous>, transform_indices = @transform_9, window_bounds = array<i64: 128, 128>}, {pipeline_mode = #tpu.pipeline_mode<synchronous>, transform_indices = @transform_10, window_bounds = array<i64: 1, 128>}, {transform_indices = @transform_11, window_bounds = array<i64: 32, 128>}]} {
    %c0 = arith.constant 0 : index
    %c0_0 = arith.constant 0 : index
    %0 = vector.load %arg1[%c0, %c0_0] : memref<32x128xf32, #tpu.memory_space<vmem>>, vector<32x128xf32>
    %c0_1 = arith.constant 0 : index
    %c0_2 = arith.constant 0 : index
    %1 = vector.load %arg2[%c0_1, %c0_2] : memref<128x128xf32, #tpu.memory_space<vmem>>, vector<128x128xf32>
    %cst = arith.constant dense<0.000000e+00> : vector<32x128xf32>
    %2 = tpu.matmul %0, %1, %cst {dimension_numbers = #tpu.dot_dimension_numbers<[1], [0], [0], [1], [0, 0, 1, 1], [], []>} : vector<32x128xf32>, vector<128x128xf32>, vector<32x128xf32> -> vector<32x128xf32>
    %c0_3 = arith.constant 0 : index
    %c0_4 = arith.constant 0 : index
    %3 = vector.load %arg3[%c0_3, %c0_4] : memref<1x128xf32, #tpu.memory_space<vmem>>, vector<1x128xf32>
    %4 = vector.broadcast %3 : vector<1x128xf32> to vector<32x128xf32>
    %5 = arith.addf %2, %4 : vector<32x128xf32>
    %c0_5 = arith.constant 0 : index
    %c0_6 = arith.constant 0 : index
    %6 = vector.load %arg4[%c0_5, %c0_6] : memref<1x128xf32, #tpu.memory_space<vmem>>, vector<1x128xf32>
    %c0_7 = arith.constant 0 : index
    %c0_8 = arith.constant 0 : index
    %7 = vector.load %arg5[%c0_7, %c0_8] : memref<1x128xf32, #tpu.memory_space<vmem>>, vector<1x128xf32>
    %cst_9 = arith.constant dense<0.000000e+00> : vector<32xf32>
    %8 = vector.multi_reduction <add>, %5, %cst_9 [1] : vector<32x128xf32> to vector<32xf32>
    %9 = vector.shape_cast %8 : vector<32xf32> to vector<32x1xf32>
    %cst_10 = arith.constant 7.812500e-03 : f32
    %10 = vector.broadcast %cst_10 : f32 to vector<32x1xf32>
    %11 = arith.mulf %9, %10 : vector<32x1xf32>
    %12 = arith.mulf %5, %5 : vector<32x128xf32>
    %cst_11 = arith.constant dense<0.000000e+00> : vector<32xf32>
    %13 = vector.multi_reduction <add>, %12, %cst_11 [1] : vector<32x128xf32> to vector<32xf32>
    %14 = vector.shape_cast %13 : vector<32xf32> to vector<32x1xf32>
    %cst_12 = arith.constant 7.812500e-03 : f32
    %15 = vector.broadcast %cst_12 : f32 to vector<32x1xf32>
    %16 = arith.mulf %14, %15 : vector<32x1xf32>
    %17 = arith.mulf %11, %11 : vector<32x1xf32>
    %18 = arith.subf %16, %17 : vector<32x1xf32>
    %19 = vector.broadcast %11 : vector<32x1xf32> to vector<32x128xf32>
    %20 = arith.subf %5, %19 : vector<32x128xf32>
    %cst_13 = arith.constant 9.99999974E-6 : f32
    %21 = vector.broadcast %cst_13 : f32 to vector<32x1xf32>
    %22 = arith.addf %18, %21 : vector<32x1xf32>
    %23 = math.rsqrt %22 : vector<32x1xf32>
    %24 = vector.broadcast %23 : vector<32x1xf32> to vector<32x128xf32>
    %25 = arith.mulf %20, %24 : vector<32x128xf32>
    %26 = vector.broadcast %6 : vector<1x128xf32> to vector<32x128xf32>
    %27 = arith.mulf %25, %26 : vector<32x128xf32>
    %28 = vector.broadcast %7 : vector<1x128xf32> to vector<32x128xf32>
    %29 = arith.addf %27, %28 : vector<32x128xf32>
    %cst_14 = arith.constant 0.000000e+00 : f32
    %30 = vector.broadcast %cst_14 : f32 to vector<32x128xf32>
    %31 = arith.maximumf %29, %30 : vector<32x128xf32>
    %c0_15 = arith.constant 0 : index
    %c0_16 = arith.constant 0 : index
    %32 = vector.load %arg6[%c0_15, %c0_16] : memref<128x128xf32, #tpu.memory_space<vmem>>, vector<128x128xf32>
    %cst_17 = arith.constant dense<0.000000e+00> : vector<32x128xf32>
    %33 = tpu.matmul %31, %32, %cst_17 {dimension_numbers = #tpu.dot_dimension_numbers<[1], [0], [0], [1], [0, 0, 1, 1], [], []>} : vector<32x128xf32>, vector<128x128xf32>, vector<32x128xf32> -> vector<32x128xf32>
    %c0_18 = arith.constant 0 : index
    %c0_19 = arith.constant 0 : index
    %34 = vector.load %arg7[%c0_18, %c0_19] : memref<1x128xf32, #tpu.memory_space<vmem>>, vector<1x128xf32>
    %35 = vector.broadcast %34 : vector<1x128xf32> to vector<32x128xf32>
    %36 = arith.addf %33, %35 : vector<32x128xf32>
    %c0_20 = arith.constant 0 : index
    %c0_21 = arith.constant 0 : index
    %37 = vector.load %arg8[%c0_20, %c0_21] : memref<1x128xf32, #tpu.memory_space<vmem>>, vector<1x128xf32>
    %c0_22 = arith.constant 0 : index
    %c0_23 = arith.constant 0 : index
    %38 = vector.load %arg9[%c0_22, %c0_23] : memref<1x128xf32, #tpu.memory_space<vmem>>, vector<1x128xf32>
    %cst_24 = arith.constant dense<0.000000e+00> : vector<32xf32>
    %39 = vector.multi_reduction <add>, %36, %cst_24 [1] : vector<32x128xf32> to vector<32xf32>
    %40 = vector.shape_cast %39 : vector<32xf32> to vector<32x1xf32>
    %cst_25 = arith.constant 7.812500e-03 : f32
    %41 = vector.broadcast %cst_25 : f32 to vector<32x1xf32>
    %42 = arith.mulf %40, %41 : vector<32x1xf32>
    %43 = arith.mulf %36, %36 : vector<32x128xf32>
    %cst_26 = arith.constant dense<0.000000e+00> : vector<32xf32>
    %44 = vector.multi_reduction <add>, %43, %cst_26 [1] : vector<32x128xf32> to vector<32xf32>
    %45 = vector.shape_cast %44 : vector<32xf32> to vector<32x1xf32>
    %cst_27 = arith.constant 7.812500e-03 : f32
    %46 = vector.broadcast %cst_27 : f32 to vector<32x1xf32>
    %47 = arith.mulf %45, %46 : vector<32x1xf32>
    %48 = arith.mulf %42, %42 : vector<32x1xf32>
    %49 = arith.subf %47, %48 : vector<32x1xf32>
    %50 = vector.broadcast %42 : vector<32x1xf32> to vector<32x128xf32>
    %51 = arith.subf %36, %50 : vector<32x128xf32>
    %cst_28 = arith.constant 9.99999974E-6 : f32
    %52 = vector.broadcast %cst_28 : f32 to vector<32x1xf32>
    %53 = arith.addf %49, %52 : vector<32x1xf32>
    %54 = math.rsqrt %53 : vector<32x1xf32>
    %55 = vector.broadcast %54 : vector<32x1xf32> to vector<32x128xf32>
    %56 = arith.mulf %51, %55 : vector<32x128xf32>
    %57 = vector.broadcast %37 : vector<1x128xf32> to vector<32x128xf32>
    %58 = arith.mulf %56, %57 : vector<32x128xf32>
    %59 = vector.broadcast %38 : vector<1x128xf32> to vector<32x128xf32>
    %60 = arith.addf %58, %59 : vector<32x128xf32>
    %cst_29 = arith.constant 0.000000e+00 : f32
    %61 = vector.broadcast %cst_29 : f32 to vector<32x128xf32>
    %62 = arith.maximumf %60, %61 : vector<32x128xf32>
    %c0_30 = arith.constant 0 : index
    %c0_31 = arith.constant 0 : index
    %63 = vector.load %arg10[%c0_30, %c0_31] : memref<128x128xf32, #tpu.memory_space<vmem>>, vector<128x128xf32>
    %cst_32 = arith.constant dense<0.000000e+00> : vector<32x128xf32>
    %64 = tpu.matmul %62, %63, %cst_32 {dimension_numbers = #tpu.dot_dimension_numbers<[1], [0], [0], [1], [0, 0, 1, 1], [], []>} : vector<32x128xf32>, vector<128x128xf32>, vector<32x128xf32> -> vector<32x128xf32>
    %c0_33 = arith.constant 0 : index
    %c0_34 = arith.constant 0 : index
    %65 = vector.load %arg11[%c0_33, %c0_34] : memref<1x128xf32, #tpu.memory_space<vmem>>, vector<1x128xf32>
    %66 = vector.broadcast %65 : vector<1x128xf32> to vector<32x128xf32>
    %67 = arith.addf %64, %66 : vector<32x128xf32>
    %c0_35 = arith.constant 0 : index
    %c0_36 = arith.constant 0 : index
    %68 = vector.load %arg12[%c0_35, %c0_36] : memref<32x128xf32, #tpu.memory_space<vmem>>, vector<32x128xf32>
    tpu.vector_store %arg12[%c0_35, %c0_36], %67 {strides = array<i32>} : memref<32x128xf32, #tpu.memory_space<vmem>>, vector<32x128xf32>,
    return
  }
  func.func @transform_0(%arg0: i32) -> (i32, i32) {
    %c0_i32 = arith.constant 0 : i32
    %c0_i32_0 = arith.constant 0 : i32
    return %arg0, %c0_i32 : i32, i32
  }
  func.func @transform_1(%arg0: i32) -> (i32, i32) {
    %c0_i32 = arith.constant 0 : i32
    %c0_i32_0 = arith.constant 0 : i32
    %c0_i32_1 = arith.constant 0 : i32
    return %c0_i32, %c0_i32_0 : i32, i32
  }
  func.func @transform_2(%arg0: i32) -> (i32, i32) {
    %c0_i32 = arith.constant 0 : i32
    %c0_i32_0 = arith.constant 0 : i32
    %c0_i32_1 = arith.constant 0 : i32
    return %c0_i32, %c0_i32_0 : i32, i32
  }
  func.func @transform_3(%arg0: i32) -> (i32, i32) {
    %c0_i32 = arith.constant 0 : i32
    %c0_i32_0 = arith.constant 0 : i32
    %c0_i32_1 = arith.constant 0 : i32
    return %c0_i32, %c0_i32_0 : i32, i32
  }
  func.func @transform_4(%arg0: i32) -> (i32, i32) {
    %c0_i32 = arith.constant 0 : i32
    %c0_i32_0 = arith.constant 0 : i32
    %c0_i32_1 = arith.constant 0 : i32
    return %c0_i32, %c0_i32_0 : i32, i32
  }
  func.func @transform_5(%arg0: i32) -> (i32, i32) {
    %c0_i32 = arith.constant 0 : i32
    %c0_i32_0 = arith.constant 0 : i32
    %c0_i32_1 = arith.constant 0 : i32
    return %c0_i32, %c0_i32_0 : i32, i32
  }
  func.func @transform_6(%arg0: i32) -> (i32, i32) {
    %c0_i32 = arith.constant 0 : i32
    %c0_i32_0 = arith.constant 0 : i32
    %c0_i32_1 = arith.constant 0 : i32
    return %c0_i32, %c0_i32_0 : i32, i32
  }
  func.func @transform_7(%arg0: i32) -> (i32, i32) {
    %c0_i32 = arith.constant 0 : i32
    %c0_i32_0 = arith.constant 0 : i32
    %c0_i32_1 = arith.constant 0 : i32
    return %c0_i32, %c0_i32_0 : i32, i32
  }
  func.func @transform_8(%arg0: i32) -> (i32, i32) {
    %c0_i32 = arith.constant 0 : i32
    %c0_i32_0 = arith.constant 0 : i32
    %c0_i32_1 = arith.constant 0 : i32
    return %c0_i32, %c0_i32_0 : i32, i32
  }
  func.func @transform_9(%arg0: i32) -> (i32, i32) {
    %c0_i32 = arith.constant 0 : i32
    %c0_i32_0 = arith.constant 0 : i32
    %c0_i32_1 = arith.constant 0 : i32
    return %c0_i32, %c0_i32_0 : i32, i32
  }
  func.func @transform_10(%arg0: i32) -> (i32, i32) {
    %c0_i32 = arith.constant 0 : i32
    %c0_i32_0 = arith.constant 0 : i32
    %c0_i32_1 = arith.constant 0 : i32
    return %c0_i32, %c0_i32_0 : i32, i32
  }
  func.func @transform_11(%arg0: i32) -> (i32, i32) {
    %c0_i32 = arith.constant 0 : i32
    %c0_i32_0 = arith.constant 0 : i32
    return %arg0, %c0_i32 : i32, i32
  }
}

</mosaic_0001>

<llo_original>
// kernel: dqn_forward.1
$region0: #{dqn_forward.1}
  #allocation0 [shape = 'u32[]', space=smem, size = 0x4, offset = 0x4, fixed_abs, tag = 'smem constant byte address 0x4 - core index']
  #allocation1 [shape = 'u32[144,128]{1,0:T(1,128)}', space=vmem, size = 0x12000, scoped, tag = 'internal scratch']
  %s0 = inlined_call_operand.vmem [shape: f32[64,128], index: 0, kind: input, shape index: {}]
  %s1 = inlined_call_operand.vmem [shape: f32[128,128], index: 1, kind: input, shape index: {}]
  %s2 = inlined_call_operand.vmem [shape: f32[1,128], index: 2, kind: input, shape index: {}]
  %s3 = inlined_call_operand.vmem [shape: f32[1,128], index: 3, kind: input, shape index: {}]
  %s4 = inlined_call_operand.vmem [shape: f32[1,128], index: 4, kind: input, shape index: {}]
  %s5 = inlined_call_operand.hbm [shape: f32[128,128], index: 5, kind: input, shape index: {}]
  %s6 = inlined_call_operand.vmem [shape: f32[1,128], index: 6, kind: input, shape index: {}]
  %s7 = inlined_call_operand.vmem [shape: f32[1,128], index: 7, kind: input, shape index: {}]
  %s8 = inlined_call_operand.vmem [shape: f32[1,128], index: 8, kind: input, shape index: {}]
  %s9 = inlined_call_operand.hbm [shape: f32[128,128], index: 9, kind: input, shape index: {}]
  %s10 = inlined_call_operand.vmem [shape: f32[1,128], index: 10, kind: input, shape index: {}]
  %s11 = inlined_call_operand.vmem [shape: f32[64,128], index: 11, kind: output, shape index: {}]
  %s12 = sld [smem:[#allocation0]]
  $region85: #{dqn_forward.1} parent=0
    _
  %s14 = ssub.s32 1, %s12
  %s15 = scalar_select 0, %s14, %s12
  $region1: #{dqn_forward.1} parent=0
    #allocation2 [shape = 'u8[65536]{0}', space=vmem, size = 0x10000, scoped, tag = 'input window, operand 5, single buffered']
    #allocation3 [shape = 's32[2]{0}', space=sflag, size = 0x8, scoped, tag = 'scoped memory for dqn_forward.1']
    #allocation4 [shape = 'u8[65536]{0}', space=vmem, size = 0x10000, scoped, tag = 'input window, operand 9, single buffered']
    #allocation5 [shape = 's32[1]{0}', space=sflag, size = 0x4, scoped, tag = 'scoped memory for dqn_forward.1']
    %16 = vsyncpa [#allocation3], 0
    %17 = vsyncpa [#allocation5], 0
    loop: start=0, step=1, limit=4
    $region2: #{dqn_forward.1} parent=1 // loop_pre_header
      _
    $region3: #{dqn_forward.1} parent=1 // loop_header
      %s19 = sphi 0, %s23
      %p20 = scmp.ge.s32.totalorder %s19, 4
      %s29 = sphi 0, %s31
      %s32 = sphi 0, %s29
      %s33 = sphi 0, %s32
      %s49 = sphi 0, %s33
      %s53 = sphi 0, %s53
      %s55 = sphi 0, %s53
      %s56 = sphi 0, %s55
      %s70 = sphi 0, %s56
      %s74 = sphi 0, %s74
      %s76 = sphi 0, %s74
      %s77 = sphi 0, %s76
      %s91 = sphi 0, %s77
      %s95 = sphi 0, %s95
      %s97 = sphi 0, %s95
      %s98 = sphi 0, %s97
      %s112 = sphi 0, %s98
      %s116 = sphi 0, %s116
      %s118 = sphi 0, %s116
      %s119 = sphi 0, %s118
      %s133 = sphi 0, %s119
      %s137 = sphi 0, %s137
      %s139 = sphi 0, %s137
      %s140 = sphi 0, %s139
      %s154 = sphi 0, %s140
      %s158 = sphi 0, %s158
      %s160 = sphi 0, %s158
      %s161 = sphi 0, %s160
      %s175 = sphi 0, %s161
      %s179 = sphi 0, %s179
      %s181 = sphi 0, %s179
      %s182 = sphi 0, %s181
      %s196 = sphi 0, %s182
      %s200 = sphi 0, %s200
      %s202 = sphi 0, %s200
      %s203 = sphi 0, %s202
      %s217 = sphi 0, %s203
      %s221 = sphi 0, %s221
      %s223 = sphi 0, %s221
      %s224 = sphi 0, %s223
      %s238 = sphi 0, %s224
      %s242 = sphi 0, %s242
      %s244 = sphi 0, %s242
      %s245 = sphi 0, %s244
      %s259 = sphi 0, %s245
      %s265 = sphi 0, %s267
      %s268 = sphi 0, %s265
      %s269 = sphi 0, %s268
      %s285 = sphi 0, %s269
    $region4: #{dqn_forward.1} parent=1 // loop_header_branch
      %22 = sbr.rel (%p20) target = $region8
    $region5: #{dqn_forward.1} parent=1 // loop_body
      %s24 = ssub.s32 %s19, 1
      %s25 = ssub.s32 %s19, 2
      %s26 = sadd.s32 %s19, 1
      %s27 = ssub.s32 %s19, %s26
      %p28 = scmp.eq.s32.totalorder %s27, 0
      %s30 = sadd.s32 %s29, 1
      %s31 = scalar_select %p28, %s29, %s30
      %p34 = pneg %p28
      %p35 = scmp.eq.s32.totalorder %s19, 1
      %p36 = por %p34, %p35
      %p37 = scmp.ne.s32.totalorder %s29, %s32
      %p38 = scmp.eq.s32.totalorder %s19, 0
      %p39 = por %p37, %p38
      %p40 = scmp.ne.s32.totalorder %s29, %s32
      %p41 = scmp.eq.s32.totalorder %s24, 1
      %p42 = por %p40, %p41
      %p43 = scmp.ne.s32.totalorder %s32, %s33
      %p44 = scmp.eq.s32.totalorder %s24, 0
      %p45 = por %p43, %p44
      %p46 = scmp.ne.s32.totalorder %s32, %s33
      %p47 = scmp.eq.s32.totalorder %s25, 1
      %p48 = por %p46, %p47
      %p50 = scmp.ne.s32.totalorder %s33, %s49
      %p51 = scmp.eq.s32.totalorder %s25, 0
      %p52 = por %p50, %p51
      %s54 = sadd.s32 %s53, 1
      %p57 = scmp.eq.s32.totalorder %s19, 1
      %p58 = scmp.ne.s32.totalorder %s53, %s55
      %p59 = scmp.eq.s32.totalorder %s19, 0
      %p60 = por %p58, %p59
      %p61 = scmp.ne.s32.totalorder %s53, %s55
      %p62 = scmp.eq.s32.totalorder %s24, 1
      %p63 = por %p61, %p62
      %p64 = scmp.ne.s32.totalorder %s55, %s56
      %p65 = scmp.eq.s32.totalorder %s24, 0
      %p66 = por %p64, %p65
      %p67 = scmp.ne.s32.totalorder %s55, %s56
      %p68 = scmp.eq.s32.totalorder %s25, 1
      %p69 = por %p67, %p68
      %p71 = scmp.ne.s32.totalorder %s56, %s70
      %p72 = scmp.eq.s32.totalorder %s25, 0
      %p73 = por %p71, %p72
      %s75 = sadd.s32 %s74, 1
      %p78 = scmp.eq.s32.totalorder %s19, 1
      %p79 = scmp.ne.s32.totalorder %s74, %s76
      %p80 = scmp.eq.s32.totalorder %s19, 0
      %p81 = por %p79, %p80
      %p82 = scmp.ne.s32.totalorder %s74, %s76
      %p83 = scmp.eq.s32.totalorder %s24, 1
      %p84 = por %p82, %p83
      %p85 = scmp.ne.s32.totalorder %s76, %s77
      %p86 = scmp.eq.s32.totalorder %s24, 0
      %p87 = por %p85, %p86
      %p88 = scmp.ne.s32.totalorder %s76, %s77
      %p89 = scmp.eq.s32.totalorder %s25, 1
      %p90 = por %p88, %p89
      %p92 = scmp.ne.s32.totalorder %s77, %s91
      %p93 = scmp.eq.s32.totalorder %s25, 0
      %p94 = por %p92, %p93
      %s96 = sadd.s32 %s95, 1
      %p99 = scmp.eq.s32.totalorder %s19, 1
      %p100 = scmp.ne.s32.totalorder %s95, %s97
      %p101 = scmp.eq.s32.totalorder %s19, 0
      %p102 = por %p100, %p101
      %p103 = scmp.ne.s32.totalorder %s95, %s97
      %p104 = scmp.eq.s32.totalorder %s24, 1
      %p105 = por %p103, %p104
      %p106 = scmp.ne.s32.totalorder %s97, %s98
      %p107 = scmp.eq.s32.totalorder %s24, 0
      %p108 = por %p106, %p107
      %p109 = scmp.ne.s32.totalorder %s97, %s98
      %p110 = scmp.eq.s32.totalorder %s25, 1
      %p111 = por %p109, %p110
      %p113 = scmp.ne.s32.totalorder %s98, %s112
      %p114 = scmp.eq.s32.totalorder %s25, 0
      %p115 = por %p113, %p114
      %s117 = sadd.s32 %s116, 1
      %p120 = scmp.eq.s32.totalorder %s19, 1
      %p121 = scmp.ne.s32.totalorder %s116, %s118
      %p122 = scmp.eq.s32.totalorder %s19, 0
      %p123 = por %p121, %p122
      %p124 = scmp.ne.s32.totalorder %s116, %s118
      %p125 = scmp.eq.s32.totalorder %s24, 1
      %p126 = por %p124, %p125
      %p127 = scmp.ne.s32.totalorder %s118, %s119
      %p128 = scmp.eq.s32.totalorder %s24, 0
      %p129 = por %p127, %p128
      %p130 = scmp.ne.s32.totalorder %s118, %s119
      %p131 = scmp.eq.s32.totalorder %s25, 1
      %p132 = por %p130, %p131
      %p134 = scmp.ne.s32.totalorder %s119, %s133
      %p135 = scmp.eq.s32.totalorder %s25, 0
      %p136 = por %p134, %p135
      %s138 = sadd.s32 %s137, 1
      %p141 = scmp.eq.s32.totalorder %s19, 1
      %p142 = scmp.ne.s32.totalorder %s137, %s139
      %p143 = scmp.eq.s32.totalorder %s19, 0
      %p144 = por %p142, %p143
      %p145 = scmp.ne.s32.totalorder %s137, %s139
      %p146 = scmp.eq.s32.totalorder %s24, 1
      %p147 = por %p145, %p146
      %p148 = scmp.ne.s32.totalorder %s139, %s140
      %p149 = scmp.eq.s32.totalorder %s24, 0
      %p150 = por %p148, %p149
      %p151 = scmp.ne.s32.totalorder %s139, %s140
      %p152 = scmp.eq.s32.totalorder %s25, 1
      %p153 = por %p151, %p152
      %p155 = scmp.ne.s32.totalorder %s140, %s154
      %p156 = scmp.eq.s32.totalorder %s25, 0
      %p157 = por %p155, %p156
      %s159 = sadd.s32 %s158, 1
      %p162 = scmp.eq.s32.totalorder %s19, 1
      %p163 = scmp.ne.s32.totalorder %s158, %s160
      %p164 = scmp.eq.s32.totalorder %s19, 0
      %p165 = por %p163, %p164
      %p166 = scmp.ne.s32.totalorder %s158, %s160
      %p167 = scmp.eq.s32.totalorder %s24, 1
      %p168 = por %p166, %p167
      %p169 = scmp.ne.s32.totalorder %s160, %s161
      %p170 = scmp.eq.s32.totalorder %s24, 0
      %p171 = por %p169, %p170
      %p172 = scmp.ne.s32.totalorder %s160, %s161
      %p173 = scmp.eq.s32.totalorder %s25, 1
      %p174 = por %p172, %p173
      %p176 = scmp.ne.s32.totalorder %s161, %s175
      %p177 = scmp.eq.s32.totalorder %s25, 0
      %p178 = por %p176, %p177
      %s180 = sadd.s32 %s179, 1
      %p183 = scmp.eq.s32.totalorder %s19, 1
      %p184 = scmp.ne.s32.totalorder %s179, %s181
      %p185 = scmp.eq.s32.totalorder %s19, 0
      %p186 = por %p184, %p185
      %p187 = scmp.ne.s32.totalorder %s179, %s181
      %p188 = scmp.eq.s32.totalorder %s24, 1
      %p189 = por %p187, %p188
      %p190 = scmp.ne.s32.totalorder %s181, %s182
      %p191 = scmp.eq.s32.totalorder %s24, 0
      %p192 = por %p190, %p191
      %p193 = scmp.ne.s32.totalorder %s181, %s182
      %p194 = scmp.eq.s32.totalorder %s25, 1
      %p195 = por %p193, %p194
      %p197 = scmp.ne.s32.totalorder %s182, %s196
      %p198 = scmp.eq.s32.totalorder %s25, 0
      %p199 = por %p197, %p198
      %s201 = sadd.s32 %s200, 1
      %p204 = scmp.eq.s32.totalorder %s19, 1
      %p205 = scmp.ne.s32.totalorder %s200, %s202
      %p206 = scmp.eq.s32.totalorder %s19, 0
      %p207 = por %p205, %p206
      %p208 = scmp.ne.s32.totalorder %s200, %s202
      %p209 = scmp.eq.s32.totalorder %s24, 1
      %p210 = por %p208, %p209
      %p211 = scmp.ne.s32.totalorder %s202, %s203
      %p212 = scmp.eq.s32.totalorder %s24, 0
      %p213 = por %p211, %p212
      %p214 = scmp.ne.s32.totalorder %s202, %s203
      %p215 = scmp.eq.s32.totalorder %s25, 1
      %p216 = por %p214, %p215
      %p218 = scmp.ne.s32.totalorder %s203, %s217
      %p219 = scmp.eq.s32.totalorder %s25, 0
      %p220 = por %p218, %p219
      %s222 = sadd.s32 %s221, 1
      %p225 = scmp.eq.s32.totalorder %s19, 1
      %p226 = scmp.ne.s32.totalorder %s221, %s223
      %p227 = scmp.eq.s32.totalorder %s19, 0
      %p228 = por %p226, %p227
      %p229 = scmp.ne.s32.totalorder %s221, %s223
      %p230 = scmp.eq.s32.totalorder %s24, 1
      %p231 = por %p229, %p230
      %p232 = scmp.ne.s32.totalorder %s223, %s224
      %p233 = scmp.eq.s32.totalorder %s24, 0
      %p234 = por %p232, %p233
      %p235 = scmp.ne.s32.totalorder %s223, %s224
      %p236 = scmp.eq.s32.totalorder %s25, 1
      %p237 = por %p235, %p236
      %p239 = scmp.ne.s32.totalorder %s224, %s238
      %p240 = scmp.eq.s32.totalorder %s25, 0
      %p241 = por %p239, %p240
      %s243 = sadd.s32 %s242, 1
      %p246 = scmp.eq.s32.totalorder %s19, 1
      %p247 = scmp.ne.s32.totalorder %s242, %s244
      %p248 = scmp.eq.s32.totalorder %s19, 0
      %p249 = por %p247, %p248
      %p250 = scmp.ne.s32.totalorder %s242, %s244
      %p251 = scmp.eq.s32.totalorder %s24, 1
      %p252 = por %p250, %p251
      %p253 = scmp.ne.s32.totalorder %s244, %s245
      %p254 = scmp.eq.s32.totalorder %s24, 0
      %p255 = por %p253, %p254
      %p256 = scmp.ne.s32.totalorder %s244, %s245
      %p257 = scmp.eq.s32.totalorder %s25, 1
      %p258 = por %p256, %p257
      %p260 = scmp.ne.s32.totalorder %s245, %s259
      %p261 = scmp.eq.s32.totalorder %s25, 0
      %p262 = por %p260, %p261
      %s263 = ssub.s32 %s19, %s26
      %p264 = scmp.eq.s32.totalorder %s263, 0
      %s266 = sadd.s32 %s265, 1
      %s267 = scalar_select %p264, %s265, %s266
      %p270 = pneg %p264
      %p271 = scmp.eq.s32.totalorder %s19, 1
      %p272 = por %p270, %p271
      %p273 = scmp.ne.s32.totalorder %s265, %s268
      %p274 = scmp.eq.s32.totalorder %s19, 0
      %p275 = por %p273, %p274
      %p276 = scmp.ne.s32.totalorder %s265, %s268
      %p277 = scmp.eq.s32.totalorder %s24, 1
      %p278 = por %p276, %p277
      %p279 = scmp.ne.s32.totalorder %s268, %s269
      %p280 = scmp.eq.s32.totalorder %s24, 0
      %p281 = por %p279, %p280
      %p282 = scmp.ne.s32.totalorder %s268, %s269
      %p283 = scmp.eq.s32.totalorder %s25, 1
      %p284 = por %p282, %p283
      %p286 = scmp.ne.s32.totalorder %s269, %s285
      %p287 = scmp.eq.s32.totalorder %s25, 0
      %p288 = por %p286, %p287
      %p289 = scmp.le.s32.totalorder 1, %s19
      %p290 = scmp.lt.s32.totalorder %s19, 3
      %p291 = pnand %p289, %p290
      %p292 = pneg %p291
      // Predicated region
      $region9: #{dqn_forward.1} parent=5 // pred_check
        _
      $region10: #{dqn_forward.1} parent=5 // pred_check_branch
        %294 = sbr.rel (%p291) target = $region12
      $region11: #{dqn_forward.1} parent=5 // pred_region
        %s295 = ssub.s32 %s19, 1
        // Predicated region
        $region13: #{dqn_forward.1} parent=11 // pred_check
          %p296 = pneg %p66
        $region14: #{dqn_forward.1} parent=11 // pred_check_branch
          %298 = sbr.rel (%p296) target = $region16
        $region15: #{dqn_forward.1} parent=11 // pred_region
          _
        $region16: #{dqn_forward.1} parent=11 // pred_fallthru
          _
        // Predicated region
        $region17: #{dqn_forward.1} parent=11 // pred_check
          %p299 = pneg %p87
        $region18: #{dqn_forward.1} parent=11 // pred_check_branch
          %301 = sbr.rel (%p299) target = $region20
        $region19: #{dqn_forward.1} parent=11 // pred_region
          _
        $region20: #{dqn_forward.1} parent=11 // pred_fallthru
          _
        // Predicated region
        $region21: #{dqn_forward.1} parent=11 // pred_check
          %p302 = pneg %p108
        $region22: #{dqn_forward.1} parent=11 // pred_check_branch
          %304 = sbr.rel (%p302) target = $region24
        $region23: #{dqn_forward.1} parent=11 // pred_region
          _
        $region24: #{dqn_forward.1} parent=11 // pred_fallthru
          _
        // Predicated region
        $region25: #{dqn_forward.1} parent=11 // pred_check
          %p305 = pneg %p129
        $region26: #{dqn_forward.1} parent=11 // pred_check_branch
          %307 = sbr.rel (%p305) target = $region28
        $region27: #{dqn_forward.1} parent=11 // pred_region
          _
        $region28: #{dqn_forward.1} parent=11 // pred_fallthru
          _
        // Predicated region
        $region29: #{dqn_forward.1} parent=11 // pred_check
          %p308 = pneg %p150
        $region30: #{dqn_forward.1} parent=11 // pred_check_branch
          %310 = sbr.rel (%p308) target = $region32
        $region31: #{dqn_forward.1} parent=11 // pred_region
          %s312 = ssub.s32 2048, 2048
          %313 = vsyncadd [#allocation3], %s312
          %s314 = sshll.u32 [#allocation2], 4
          %s315 = int_to_ptr.vmem [resolvable:$true] %s314
          %320 = dma.hbm_to_vmem [thread:$0]  %s5, 2048, %s315, [#allocation3], 128, 128, 8
        $region32: #{dqn_forward.1} parent=11 // pred_fallthru
          _
        // Predicated region
        $region33: #{dqn_forward.1} parent=11 // pred_check
          %p321 = pneg %p171
        $region34: #{dqn_forward.1} parent=11 // pred_check_branch
          %323 = sbr.rel (%p321) target = $region36
        $region35: #{dqn_forward.1} parent=11 // pred_region
          _
        $region36: #{dqn_forward.1} parent=11 // pred_fallthru
          _
        // Predicated region
        $region37: #{dqn_forward.1} parent=11 // pred_check
          %p324 = pneg %p192
        $region38: #{dqn_forward.1} parent=11 // pred_check_branch
          %326 = sbr.rel (%p324) target = $region40
        $region39: #{dqn_forward.1} parent=11 // pred_region
          _
        $region40: #{dqn_forward.1} parent=11 // pred_fallthru
          _
        // Predicated region
        $region41: #{dqn_forward.1} parent=11 // pred_check
          %p327 = pneg %p213
        $region42: #{dqn_forward.1} parent=11 // pred_check_branch
          %329 = sbr.rel (%p327) target = $region44
        $region43: #{dqn_forward.1} parent=11 // pred_region
          _
        $region44: #{dqn_forward.1} parent=11 // pred_fallthru
          _
        // Predicated region
        $region45: #{dqn_forward.1} parent=11 // pred_check
          %p330 = pneg %p234
        $region46: #{dqn_forward.1} parent=11 // pred_check_branch
          %332 = sbr.rel (%p330) target = $region48
        $region47: #{dqn_forward.1} parent=11 // pred_region
          %s334 = ssub.s32 2048, 2048
          %335 = vsyncadd [#allocation5], %s334
          %s336 = sshll.u32 [#allocation4], 4
          %s337 = int_to_ptr.vmem [resolvable:$true] %s336
          %342 = dma.hbm_to_vmem [thread:$0]  %s9, 2048, %s337, [#allocation5], 128, 128, 8
        $region48: #{dqn_forward.1} parent=11 // pred_fallthru
          _
        // Predicated region
        $region49: #{dqn_forward.1} parent=11 // pred_check
          %p343 = pneg %p255
        $region50: #{dqn_forward.1} parent=11 // pred_check_branch
          %345 = sbr.rel (%p343) target = $region52
        $region51: #{dqn_forward.1} parent=11 // pred_region
          _
        $region52: #{dqn_forward.1} parent=11 // pred_fallthru
          _
      $region12: #{dqn_forward.1} parent=5 // pred_fallthru
        _
      %p346 = scmp.lt.s32.totalorder %s19, 2
      // Predicated region
      $region53: #{dqn_forward.1} parent=5 // pred_check
        %p347 = pneg %p346
      $region54: #{dqn_forward.1} parent=5 // pred_check_branch
        %349 = sbr.rel (%p347) target = $region56
      $region55: #{dqn_forward.1} parent=5 // pred_region
        // Predicated region
        $region57: #{dqn_forward.1} parent=55 // pred_check
          %p350 = pneg %p39
        $region58: #{dqn_forward.1} parent=55 // pred_check_branch
          %352 = sbr.rel (%p350) target = $region60
        $region59: #{dqn_forward.1} parent=55 // pred_region
          %s353 = smul.u32 4, %s19
          %p354 = scmp.lt.s32.totalorder %s353, 7
          %s355 = scalar_select %p354, %s353, 7
          %s356 = smul.addr %s355, 8
          %s357 = scalar_lea.vmem %s0, %s356
          %s358 = smul.u32 4, %s19
        $region60: #{dqn_forward.1} parent=55 // pred_fallthru
          _
      $region56: #{dqn_forward.1} parent=5 // pred_fallthru
        _
      %p359 = scmp.le.s32.totalorder 1, %s19
      %p360 = scmp.lt.s32.totalorder %s19, 3
      %p361 = pnand %p359, %p360
      %p362 = pneg %p361
      // Predicated region
      $region61: #{dqn_forward.1} parent=5 // pred_check
        _
      $region62: #{dqn_forward.1} parent=5 // pred_check_branch
        %364 = sbr.rel (%p361) target = $region64
      $region63: #{dqn_forward.1} parent=5 // pred_region
        %s365 = ssub.s32 %s19, 1
        // Predicated region
        $region65: #{dqn_forward.1} parent=63 // pred_check
          %p366 = pneg %p150
        $region66: #{dqn_forward.1} parent=63 // pred_check_branch
          %368 = sbr.rel (%p366) target = $region68
        $region67: #{dqn_forward.1} parent=63 // pred_region
          %369 = dma.done [#allocation3], 2048
        $region68: #{dqn_forward.1} parent=63 // pred_fallthru
          _
        // Predicated region
        $region69: #{dqn_forward.1} parent=63 // pred_check
          %p370 = pneg %p234
        $region70: #{dqn_forward.1} parent=63 // pred_check_branch
          %372 = sbr.rel (%p370) target = $region72
        $region71: #{dqn_forward.1} parent=63 // pred_region
          %373 = dma.done [#allocation5], 2048
        $region72: #{dqn_forward.1} parent=63 // pred_fallthru
          _
        %s374 = smul.u32 4, %s24
        %p375 = scmp.lt.s32.totalorder %s374, 7
        %s376 = scalar_select %p375, %s374, 7
        %s377 = smul.addr %s376, 8
        %s378 = scalar_lea.vmem %s0, %s377
        %p379 = pneg %p45
        %p380 = pneg %p42
        %p381 = pneg %p66
        %p382 = pneg %p63
        %p383 = pneg %p87
        %p384 = pneg %p84
        %p385 = pneg %p108
        %p386 = pneg %p105
        %p387 = pneg %p129
        %p388 = pneg %p126
        %p389 = pneg %p150
        %p390 = pneg %p147
        %p391 = pneg %p171
        %p392 = pneg %p168
        %p393 = pneg %p192
        %p394 = pneg %p189
        %p395 = pneg %p213
        %p396 = pneg %p210
        %p397 = pneg %p234
        %p398 = pneg %p231
        %p399 = pneg %p255
        %p400 = pneg %p252
        %p401 = pneg %p281
        %p402 = pneg %p278
        %s403 = smul.u32 4, %s24
        %p404 = scmp.lt.s32.totalorder %s403, 7
        %s405 = scalar_select %p404, %s403, 7
        %s406 = smul.addr %s405, 8
        %s407 = scalar_lea.vmem %s11, %s406
        %s408 = smul.u32 4, %s24
        %p409 = scmp.lt.s32.totalorder %s408, 7
        %s410 = scalar_select %p409, %s408, 7
        %s411 = smul.addr %s410, 8
        %s412 = scalar_lea.vmem %s0, %s411
        %s413 = smul.u32 4, %s24
        %s414 = smul.u32 4, %s24
        %p415 = scmp.lt.s32.totalorder %s414, 7
        %s416 = scalar_select %p415, %s414, 7
        %s417 = smul.addr %s416, 8
        %s418 = scalar_lea.vmem %s11, %s417
        %s419 = smul.u32 4, %s24
        %v420 = vld [vmem:[%s412] sm:$0xff]
        %v421 = vld [vmem:[%s412 + $0x8] sm:$0xff]
        %v422 = vld [vmem:[%s412 + $0x10] sm:$0xff]
        %v423 = vld [vmem:[%s412 + $0x18] sm:$0xff]
        %v424 = vld [vmem:[%s1] sm:$0xff]
        %v425 = vld [vmem:[%s1 + $0x8] sm:$0xff]
        %v426 = vld [vmem:[%s1 + $0x10] sm:$0xff]
        %v427 = vld [vmem:[%s1 + $0x18] sm:$0xff]
        %v428 = vld [vmem:[%s1 + $0x20] sm:$0xff]
        %v429 = vld [vmem:[%s1 + $0x28] sm:$0xff]
        %v430 = vld [vmem:[%s1 + $0x30] sm:$0xff]
        %v431 = vld [vmem:[%s1 + $0x38] sm:$0xff]
        %v432 = vld [vmem:[%s1 + $0x40] sm:$0xff]
        %v433 = vld [vmem:[%s1 + $0x48] sm:$0xff]
        %v434 = vld [vmem:[%s1 + $0x50] sm:$0xff]
        %v435 = vld [vmem:[%s1 + $0x58] sm:$0xff]
        %v436 = vld [vmem:[%s1 + $0x60] sm:$0xff]
        %v437 = vld [vmem:[%s1 + $0x68] sm:$0xff]
        %v438 = vld [vmem:[%s1 + $0x70] sm:$0xff]
        %v439 = vld [vmem:[%s1 + $0x78] sm:$0xff]
        %v440 = vld [vmem:[%s2] sm:$0x1]
        %v442 = vlaneseq
        %v443 = vshrl.u32 %v442, 7
        %v444 = vsub.s32 0, %v443
        %v445 = vrot.slane %v440, %v444
        %447 = vmatprep.subr.mxu0 0.0
        %448 = vmatpush1.msra.mxu0 %v424
        %449 = vmatprep.subr.mxu0 0.0
        %450 = vmatpush1.msra.mxu0 %v425
        %451 = vmatprep.subr.mxu0 0.0
        %452 = vmatpush1.msra.mxu0 %v426
        %453 = vmatprep.subr.mxu0 0.0
        %454 = vmatpush1.msra.mxu0 %v427
        %455 = vmatprep.subr.mxu0 0.0
        %456 = vmatpush1.msra.mxu0 %v428
        %457 = vmatprep.subr.mxu0 0.0
        %458 = vmatpush1.msra.mxu0 %v429
        %459 = vmatprep.subr.mxu0 0.0
        %460 = vmatpush1.msra.mxu0 %v430
        %461 = vmatprep.subr.mxu0 0.0
        %462 = vmatpush1.msra.mxu0 %v431
        %463 = vmatprep.subr.mxu0 0.0
        %464 = vmatpush1.msra.mxu0 %v432
        %465 = vmatprep.subr.mxu0 0.0
        %466 = vmatpush1.msra.mxu0 %v433
        %467 = vmatprep.subr.mxu0 0.0
        %468 = vmatpush1.msra.mxu0 %v434
        %469 = vmatprep.subr.mxu0 0.0
        %470 = vmatpush1.msra.mxu0 %v435
        %471 = vmatprep.subr.mxu0 0.0
        %472 = vmatpush1.msra.mxu0 %v436
        %473 = vmatprep.subr.mxu0 0.0
        %474 = vmatpush1.msra.mxu0 %v437
        %475 = vmatprep.subr.mxu0 0.0
        %476 = vmatpush1.msra.mxu0 %v438
        %477 = vmatprep.subr.mxu0 0.0
        %478 = vmatpush1.msra.mxu0 %v439
        %479 = vmatprep.subr.mxu0 0.0
        %480 = vmatpush1.msra.mxu0 0.0
        %481 = vmatprep.subr.mxu0 0.0
        %482 = vmatpush1.msra.mxu0 0.0
        %483 = vmatprep.subr.mxu0 0.0
        %484 = vmatpush1.msra.mxu0 0.0
        %485 = vmatprep.subr.mxu0 0.0
        %486 = vmatpush1.msra.mxu0 0.0
        %487 = vmatprep.subr.mxu0 0.0
        %488 = vmatpush1.msra.mxu0 0.0
        %489 = vmatprep.subr.mxu0 0.0
        %490 = vmatpush1.msra.mxu0 0.0
        %491 = vmatprep.subr.mxu0 0.0
        %492 = vmatpush1.msra.mxu0 0.0
        %493 = vmatprep.subr.mxu0 0.0
        %494 = vmatpush1.msra.mxu0 0.0
        %495 = vmatprep.subr.mxu0 0.0
        %496 = vmatpush1.msra.mxu0 0.0
        %497 = vmatprep.subr.mxu0 0.0
        %498 = vmatpush1.msra.mxu0 0.0
        %499 = vmatprep.subr.mxu0 0.0
        %500 = vmatpush1.msra.mxu0 0.0
        %501 = vmatprep.subr.mxu0 0.0
        %502 = vmatpush1.msra.mxu0 0.0
        %503 = vmatprep.subr.mxu0 0.0
        %504 = vmatpush1.msra.mxu0 0.0
        %505 = vmatprep.subr.mxu0 0.0
        %506 = vmatpush1.msra.mxu0 0.0
        %507 = vmatprep.subr.mxu0 0.0
        %508 = vmatpush1.msra.mxu0 0.0
        %509 = vmatprep.subr.mxu0 0.0
        %510 = vmatpush1.msra.mxu0 0.0
        %511 = vmatprep.mubr.f32.mxu0 0.0
        %512 = vmatmul.mubr.f32.gmra.mrb[0].mxu0 %v420
        %v513 = vpop.f32.mrb[0].mxu0
        %v514 = vadd.f32 %v445, %v513
        %v515 = vpop.f32.mrb[0].mxu0
        %516 = vmatprep.mubr.f32.mxu0 0.0
        %517 = vmatmul.mubr.f32.gmra.mrb[0].mxu0 %v421
        %v518 = vpop.f32.mrb[0].mxu0
        %v519 = vadd.f32 %v445, %v518
        %v520 = vpop.f32.mrb[0].mxu0
        %521 = vmatprep.mubr.f32.mxu0 0.0
        %522 = vmatmul.mubr.f32.gmra.mrb[0].mxu0 %v422
        %v523 = vpop.f32.mrb[0].mxu0
        %v524 = vadd.f32 %v445, %v523
        %v525 = vpop.f32.mrb[0].mxu0
        %526 = vmatprep.mubr.f32.mxu0 0.0
        %527 = vmatmul.mubr.f32.gmra.mrb[0].mxu0 %v423
        %v528 = vpop.f32.mrb[0].mxu0
        %v529 = vadd.f32 %v445, %v528
        %v530 = vpop.f32.mrb[0].mxu0
        %531 = vdwg.mxu0
        %v532 = vld [vmem:[%s3] sm:$0x1]
        %v533 = vld [vmem:[%s4] sm:$0x1]
        %534 = vadd.xlane.f32.xlu0 %v514
        %v535 = vpop.xlane.xlu0 %534
        %536 = vadd.xlane.f32.xlu0 %v519
        %v537 = vpop.xlane.xlu0 %536
        %538 = vadd.xlane.f32.xlu0 %v524
        %v539 = vpop.xlane.xlu0 %538
        %540 = vadd.xlane.f32.xlu0 %v529
        %v541 = vpop.xlane.xlu0 %540
        %v542 = vmul.f32 %v535, 0.0078125
        %v543 = vmul.f32 %v537, 0.0078125
        %v544 = vmul.f32 %v539, 0.0078125
        %v545 = vmul.f32 %v541, 0.0078125
        %v546 = vmul.f32 %v514, %v514
        %v547 = vmul.f32 %v519, %v519
        %v548 = vmul.f32 %v524, %v524
        %v549 = vmul.f32 %v529, %v529
        %550 = vadd.xlane.f32.xlu0 %v546
        %v551 = vpop.xlane.xlu0 %550
        %552 = vadd.xlane.f32.xlu0 %v547
        %v553 = vpop.xlane.xlu0 %552
        %554 = vadd.xlane.f32.xlu0 %v548
        %v555 = vpop.xlane.xlu0 %554
        %556 = vadd.xlane.f32.xlu0 %v549
        %v557 = vpop.xlane.xlu0 %556
        %v558 = vmul.f32 %v551, 0.0078125
        %v559 = vmul.f32 %v553, 0.0078125
        %v560 = vmul.f32 %v555, 0.0078125
        %v561 = vmul.f32 %v557, 0.0078125
        %v562 = vmul.f32 %v542, %v542
        %v563 = vmul.f32 %v543, %v543
        %v564 = vmul.f32 %v544, %v544
        %v565 = vmul.f32 %v545, %v545
        %v566 = vsub.f32 %v558, %v562
        %v567 = vsub.f32 %v559, %v563
        %v568 = vsub.f32 %v560, %v564
        %v569 = vsub.f32 %v561, %v565
        %v570 = vsub.f32 %v514, %v542
        %v571 = vsub.f32 %v519, %v543
        %v572 = vsub.f32 %v524, %v544
        %v573 = vsub.f32 %v529, %v545
        %v574 = vadd.f32 %v566, 1e-05
        %v575 = vadd.f32 %v567, 1e-05
        %v576 = vadd.f32 %v568, 1e-05
        %v577 = vadd.f32 %v569, 1e-05
        %v578 = vrsqrt.pop %v574
        %v579 = vrsqrt.pop %v575
        %v580 = vrsqrt.pop %v576
        %v581 = vrsqrt.pop %v577
        %v582 = vmul.f32 %v570, %v578
        %v583 = vmul.f32 %v571, %v579
        %v584 = vmul.f32 %v572, %v580
        %v585 = vmul.f32 %v573, %v581
        %v587 = vlaneseq
        %v588 = vshrl.u32 %v587, 7
        %v589 = vsub.s32 0, %v588
        %v590 = vrot.slane %v532, %v589
        %v592 = vmul.f32 %v582, %v590
        %v593 = vmul.f32 %v583, %v590
        %v594 = vmul.f32 %v584, %v590
        %v595 = vmul.f32 %v585, %v590
        %v597 = vlaneseq
        %v598 = vshrl.u32 %v597, 7
        %v599 = vsub.s32 0, %v598
        %v600 = vrot.slane %v533, %v599
        %v602 = vadd.f32 %v592, %v600
        %v603 = vadd.f32 %v593, %v600
        %v604 = vadd.f32 %v594, %v600
        %v605 = vadd.f32 %v595, %v600
        %v606 = vmax.f32 %v602, 0.0
        %v607 = vmax.f32 %v603, 0.0
        %v608 = vmax.f32 %v604, 0.0
        %v609 = vmax.f32 %v605, 0.0
        %v610 = vld [vmem:[#allocation2] sm:$0xff]
        %v611 = vld [vmem:[#allocation2 + $0x8] sm:$0xff]
        %v612 = vld [vmem:[#allocation2 + $0x10] sm:$0xff]
        %v613 = vld [vmem:[#allocation2 + $0x18] sm:$0xff]
        %v614 = vld [vmem:[#allocation2 + $0x20] sm:$0xff]
        %v615 = vld [vmem:[#allocation2 + $0x28] sm:$0xff]
        %v616 = vld [vmem:[#allocation2 + $0x30] sm:$0xff]
        %v617 = vld [vmem:[#allocation2 + $0x38] sm:$0xff]
        %v618 = vld [vmem:[#allocation2 + $0x40] sm:$0xff]
        %v619 = vld [vmem:[#allocation2 + $0x48] sm:$0xff]
        %v620 = vld [vmem:[#allocation2 + $0x50] sm:$0xff]
        %v621 = vld [vmem:[#allocation2 + $0x58] sm:$0xff]
        %v622 = vld [vmem:[#allocation2 + $0x60] sm:$0xff]
        %v623 = vld [vmem:[#allocation2 + $0x68] sm:$0xff]
        %v624 = vld [vmem:[#allocation2 + $0x70] sm:$0xff]
        %v625 = vld [vmem:[#allocation2 + $0x78] sm:$0xff]
        %v626 = vld [vmem:[%s6] sm:$0x1]
        %v628 = vlaneseq
        %v629 = vshrl.u32 %v628, 7
        %v630 = vsub.s32 0, %v629
        %v631 = vrot.slane %v626, %v630
        %633 = vmatprep.subr.mxu0 0.0
        %634 = vmatpush1.msra.mxu0 %v610
        %635 = vmatprep.subr.mxu0 0.0
        %636 = vmatpush1.msra.mxu0 %v611
        %637 = vmatprep.subr.mxu0 0.0
        %638 = vmatpush1.msra.mxu0 %v612
        %639 = vmatprep.subr.mxu0 0.0
        %640 = vmatpush1.msra.mxu0 %v613
        %641 = vmatprep.subr.mxu0 0.0
        %642 = vmatpush1.msra.mxu0 %v614
        %643 = vmatprep.subr.mxu0 0.0
        %644 = vmatpush1.msra.mxu0 %v615
        %645 = vmatprep.subr.mxu0 0.0
        %646 = vmatpush1.msra.mxu0 %v616
        %647 = vmatprep.subr.mxu0 0.0
        %648 = vmatpush1.msra.mxu0 %v617
        %649 = vmatprep.subr.mxu0 0.0
        %650 = vmatpush1.msra.mxu0 %v618
        %651 = vmatprep.subr.mxu0 0.0
        %652 = vmatpush1.msra.mxu0 %v619
        %653 = vmatprep.subr.mxu0 0.0
        %654 = vmatpush1.msra.mxu0 %v620
        %655 = vmatprep.subr.mxu0 0.0
        %656 = vmatpush1.msra.mxu0 %v621
        %657 = vmatprep.subr.mxu0 0.0
        %658 = vmatpush1.msra.mxu0 %v622
        %659 = vmatprep.subr.mxu0 0.0
        %660 = vmatpush1.msra.mxu0 %v623
        %661 = vmatprep.subr.mxu0 0.0
        %662 = vmatpush1.msra.mxu0 %v624
        %663 = vmatprep.subr.mxu0 0.0
        %664 = vmatpush1.msra.mxu0 %v625
        %665 = vmatprep.subr.mxu0 0.0
        %666 = vmatpush1.msra.mxu0 0.0
        %667 = vmatprep.subr.mxu0 0.0
        %668 = vmatpush1.msra.mxu0 0.0
        %669 = vmatprep.subr.mxu0 0.0
        %670 = vmatpush1.msra.mxu0 0.0
        %671 = vmatprep.subr.mxu0 0.0
        %672 = vmatpush1.msra.mxu0 0.0
        %673 = vmatprep.subr.mxu0 0.0
        %674 = vmatpush1.msra.mxu0 0.0
        %675 = vmatprep.subr.mxu0 0.0
        %676 = vmatpush1.msra.mxu0 0.0
        %677 = vmatprep.subr.mxu0 0.0
        %678 = vmatpush1.msra.mxu0 0.0
        %679 = vmatprep.subr.mxu0 0.0
        %680 = vmatpush1.msra.mxu0 0.0
        %681 = vmatprep.subr.mxu0 0.0
        %682 = vmatpush1.msra.mxu0 0.0
        %683 = vmatprep.subr.mxu0 0.0
        %684 = vmatpush1.msra.mxu0 0.0
        %685 = vmatprep.subr.mxu0 0.0
        %686 = vmatpush1.msra.mxu0 0.0
        %687 = vmatprep.subr.mxu0 0.0
        %688 = vmatpush1.msra.mxu0 0.0
        %689 = vmatprep.subr.mxu0 0.0
        %690 = vmatpush1.msra.mxu0 0.0
        %691 = vmatprep.subr.mxu0 0.0
        %692 = vmatpush1.msra.mxu0 0.0
        %693 = vmatprep.subr.mxu0 0.0
        %694 = vmatpush1.msra.mxu0 0.0
        %695 = vmatprep.subr.mxu0 0.0
        %696 = vmatpush1.msra.mxu0 0.0
        %697 = vmatprep.mubr.f32.mxu0 0.0
        %698 = vmatmul.mubr.f32.gmra.mrb[0].mxu0 %v606
        %v699 = vpop.f32.mrb[0].mxu0
        %v700 = vadd.f32 %v631, %v699
        %v701 = vpop.f32.mrb[0].mxu0
        %702 = vmatprep.mubr.f32.mxu0 0.0
        %703 = vmatmul.mubr.f32.gmra.mrb[0].mxu0 %v607
        %v704 = vpop.f32.mrb[0].mxu0
        %v705 = vadd.f32 %v631, %v704
        %v706 = vpop.f32.mrb[0].mxu0
        %707 = vmatprep.mubr.f32.mxu0 0.0
        %708 = vmatmul.mubr.f32.gmra.mrb[0].mxu0 %v608
        %v709 = vpop.f32.mrb[0].mxu0
        %v710 = vadd.f32 %v631, %v709
        %v711 = vpop.f32.mrb[0].mxu0
        %712 = vmatprep.mubr.f32.mxu0 0.0
        %713 = vmatmul.mubr.f32.gmra.mrb[0].mxu0 %v609
        %v714 = vpop.f32.mrb[0].mxu0
        %v715 = vadd.f32 %v631, %v714
        %v716 = vpop.f32.mrb[0].mxu0
        %717 = vdwg.mxu0
        %v718 = vld [vmem:[%s7] sm:$0x1]
        %v719 = vld [vmem:[%s8] sm:$0x1]
        %720 = vadd.xlane.f32.xlu0 %v700
        %v721 = vpop.xlane.xlu0 %720
        %722 = vadd.xlane.f32.xlu0 %v705
        %v723 = vpop.xlane.xlu0 %722
        %724 = vadd.xlane.f32.xlu0 %v710
        %v725 = vpop.xlane.xlu0 %724
        %726 = vadd.xlane.f32.xlu0 %v715
        %v727 = vpop.xlane.xlu0 %726
        %v728 = vmul.f32 %v721, 0.0078125
        %v729 = vmul.f32 %v723, 0.0078125
        %v730 = vmul.f32 %v725, 0.0078125
        %v731 = vmul.f32 %v727, 0.0078125
        %v732 = vmul.f32 %v700, %v700
        %v733 = vmul.f32 %v705, %v705
        %v734 = vmul.f32 %v710, %v710
        %v735 = vmul.f32 %v715, %v715
        %736 = vadd.xlane.f32.xlu0 %v732
        %v737 = vpop.xlane.xlu0 %736
        %738 = vadd.xlane.f32.xlu0 %v733
        %v739 = vpop.xlane.xlu0 %738
        %740 = vadd.xlane.f32.xlu0 %v734
        %v741 = vpop.xlane.xlu0 %740
        %742 = vadd.xlane.f32.xlu0 %v735
        %v743 = vpop.xlane.xlu0 %742
        %v744 = vmul.f32 %v737, 0.0078125
        %v745 = vmul.f32 %v739, 0.0078125
        %v746 = vmul.f32 %v741, 0.0078125
        %v747 = vmul.f32 %v743, 0.0078125
        %v748 = vmul.f32 %v728, %v728
        %v749 = vmul.f32 %v729, %v729
        %v750 = vmul.f32 %v730, %v730
        %v751 = vmul.f32 %v731, %v731
        %v752 = vsub.f32 %v744, %v748
        %v753 = vsub.f32 %v745, %v749
        %v754 = vsub.f32 %v746, %v750
        %v755 = vsub.f32 %v747, %v751
        %v756 = vsub.f32 %v700, %v728
        %v757 = vsub.f32 %v705, %v729
        %v758 = vsub.f32 %v710, %v730
        %v759 = vsub.f32 %v715, %v731
        %v760 = vadd.f32 %v752, 1e-05
        %v761 = vadd.f32 %v753, 1e-05
        %v762 = vadd.f32 %v754, 1e-05
        %v763 = vadd.f32 %v755, 1e-05
        %v764 = vrsqrt.pop %v760
        %v765 = vrsqrt.pop %v761
        %v766 = vrsqrt.pop %v762
        %v767 = vrsqrt.pop %v763
        %v768 = vmul.f32 %v756, %v764
        %v769 = vmul.f32 %v757, %v765
        %v770 = vmul.f32 %v758, %v766
        %v771 = vmul.f32 %v759, %v767
        %v773 = vlaneseq
        %v774 = vshrl.u32 %v773, 7
        %v775 = vsub.s32 0, %v774
        %v776 = vrot.slane %v718, %v775
        %v778 = vmul.f32 %v768, %v776
        %v779 = vmul.f32 %v769, %v776
        %v780 = vmul.f32 %v770, %v776
        %v781 = vmul.f32 %v771, %v776
        %v783 = vlaneseq
        %v784 = vshrl.u32 %v783, 7
        %v785 = vsub.s32 0, %v784
        %v786 = vrot.slane %v719, %v785
        %v788 = vadd.f32 %v778, %v786
        %v789 = vadd.f32 %v779, %v786
        %v790 = vadd.f32 %v780, %v786
        %v791 = vadd.f32 %v781, %v786
        %v792 = vmax.f32 %v788, 0.0
        %v793 = vmax.f32 %v789, 0.0
        %v794 = vmax.f32 %v790, 0.0
        %v795 = vmax.f32 %v791, 0.0
        %v796 = vld [vmem:[#allocation4] sm:$0xff]
        %v797 = vld [vmem:[#allocation4 + $0x8] sm:$0xff]
        %v798 = vld [vmem:[#allocation4 + $0x10] sm:$0xff]
        %v799 = vld [vmem:[#allocation4 + $0x18] sm:$0xff]
        %v800 = vld [vmem:[#allocation4 + $0x20] sm:$0xff]
        %v801 = vld [vmem:[#allocation4 + $0x28] sm:$0xff]
        %v802 = vld [vmem:[#allocation4 + $0x30] sm:$0xff]
        %v803 = vld [vmem:[#allocation4 + $0x38] sm:$0xff]
        %v804 = vld [vmem:[#allocation4 + $0x40] sm:$0xff]
        %v805 = vld [vmem:[#allocation4 + $0x48] sm:$0xff]
        %v806 = vld [vmem:[#allocation4 + $0x50] sm:$0xff]
        %v807 = vld [vmem:[#allocation4 + $0x58] sm:$0xff]
        %v808 = vld [vmem:[#allocation4 + $0x60] sm:$0xff]
        %v809 = vld [vmem:[#allocation4 + $0x68] sm:$0xff]
        %v810 = vld [vmem:[#allocation4 + $0x70] sm:$0xff]
        %v811 = vld [vmem:[#allocation4 + $0x78] sm:$0xff]
        %v812 = vld [vmem:[%s10] sm:$0x1]
        %v814 = vlaneseq
        %v815 = vshrl.u32 %v814, 7
        %v816 = vsub.s32 0, %v815
        %v817 = vrot.slane %v812, %v816
        %819 = vmatprep.subr.mxu0 0.0
        %820 = vmatpush1.msra.mxu0 %v796
        %821 = vmatprep.subr.mxu0 0.0
        %822 = vmatpush1.msra.mxu0 %v797
        %823 = vmatprep.subr.mxu0 0.0
        %824 = vmatpush1.msra.mxu0 %v798
        %825 = vmatprep.subr.mxu0 0.0
        %826 = vmatpush1.msra.mxu0 %v799
        %827 = vmatprep.subr.mxu0 0.0
        %828 = vmatpush1.msra.mxu0 %v800
        %829 = vmatprep.subr.mxu0 0.0
        %830 = vmatpush1.msra.mxu0 %v801
        %831 = vmatprep.subr.mxu0 0.0
        %832 = vmatpush1.msra.mxu0 %v802
        %833 = vmatprep.subr.mxu0 0.0
        %834 = vmatpush1.msra.mxu0 %v803
        %835 = vmatprep.subr.mxu0 0.0
        %836 = vmatpush1.msra.mxu0 %v804
        %837 = vmatprep.subr.mxu0 0.0
        %838 = vmatpush1.msra.mxu0 %v805
        %839 = vmatprep.subr.mxu0 0.0
        %840 = vmatpush1.msra.mxu0 %v806
        %841 = vmatprep.subr.mxu0 0.0
        %842 = vmatpush1.msra.mxu0 %v807
        %843 = vmatprep.subr.mxu0 0.0
        %844 = vmatpush1.msra.mxu0 %v808
        %845 = vmatprep.subr.mxu0 0.0
        %846 = vmatpush1.msra.mxu0 %v809
        %847 = vmatprep.subr.mxu0 0.0
        %848 = vmatpush1.msra.mxu0 %v810
        %849 = vmatprep.subr.mxu0 0.0
        %850 = vmatpush1.msra.mxu0 %v811
        %851 = vmatprep.subr.mxu0 0.0
        %852 = vmatpush1.msra.mxu0 0.0
        %853 = vmatprep.subr.mxu0 0.0
        %854 = vmatpush1.msra.mxu0 0.0
        %855 = vmatprep.subr.mxu0 0.0
        %856 = vmatpush1.msra.mxu0 0.0
        %857 = vmatprep.subr.mxu0 0.0
        %858 = vmatpush1.msra.mxu0 0.0
        %859 = vmatprep.subr.mxu0 0.0
        %860 = vmatpush1.msra.mxu0 0.0
        %861 = vmatprep.subr.mxu0 0.0
        %862 = vmatpush1.msra.mxu0 0.0
        %863 = vmatprep.subr.mxu0 0.0
        %864 = vmatpush1.msra.mxu0 0.0
        %865 = vmatprep.subr.mxu0 0.0
        %866 = vmatpush1.msra.mxu0 0.0
        %867 = vmatprep.subr.mxu0 0.0
        %868 = vmatpush1.msra.mxu0 0.0
        %869 = vmatprep.subr.mxu0 0.0
        %870 = vmatpush1.msra.mxu0 0.0
        %871 = vmatprep.subr.mxu0 0.0
        %872 = vmatpush1.msra.mxu0 0.0
        %873 = vmatprep.subr.mxu0 0.0
        %874 = vmatpush1.msra.mxu0 0.0
        %875 = vmatprep.subr.mxu0 0.0
        %876 = vmatpush1.msra.mxu0 0.0
        %877 = vmatprep.subr.mxu0 0.0
        %878 = vmatpush1.msra.mxu0 0.0
        %879 = vmatprep.subr.mxu0 0.0
        %880 = vmatpush1.msra.mxu0 0.0
        %881 = vmatprep.subr.mxu0 0.0
        %882 = vmatpush1.msra.mxu0 0.0
        %883 = vmatprep.mubr.f32.mxu0 0.0
        %884 = vmatmul.mubr.f32.gmra.mrb[0].mxu0 %v792
        %v885 = vpop.f32.mrb[0].mxu0
        %v886 = vadd.f32 %v817, %v885
        %v887 = vpop.f32.mrb[0].mxu0
        %888 = vmatprep.mubr.f32.mxu0 0.0
        %889 = vmatmul.mubr.f32.gmra.mrb[0].mxu0 %v793
        %v890 = vpop.f32.mrb[0].mxu0
        %v891 = vadd.f32 %v817, %v890
        %v892 = vpop.f32.mrb[0].mxu0
        %893 = vmatprep.mubr.f32.mxu0 0.0
        %894 = vmatmul.mubr.f32.gmra.mrb[0].mxu0 %v794
        %v895 = vpop.f32.mrb[0].mxu0
        %v896 = vadd.f32 %v817, %v895
        %v897 = vpop.f32.mrb[0].mxu0
        %898 = vmatprep.mubr.f32.mxu0 0.0
        %899 = vmatmul.mubr.f32.gmra.mrb[0].mxu0 %v795
        %v900 = vpop.f32.mrb[0].mxu0
        %v901 = vadd.f32 %v817, %v900
        %v902 = vpop.f32.mrb[0].mxu0
        %903 = vdwg.mxu0
        %904 = vst [vmem:[%s418] sm:$0xff] %v886
        %905 = vst [vmem:[%s418 + $0x8] sm:$0xff] %v891
        %906 = vst [vmem:[%s418 + $0x10] sm:$0xff] %v896
        %907 = vst [vmem:[%s418 + $0x18] sm:$0xff] %v901
        %s908 = smul.u32 4, %s24
        %p909 = scmp.lt.s32.totalorder %s908, 7
        %s910 = scalar_select %p909, %s908, 7
        %s911 = smul.addr %s910, 8
        %s912 = scalar_lea.vmem %s11, %s911
        // Predicated region
        $region73: #{dqn_forward.1} parent=63 // pred_check
          %p913 = pneg %p278
        $region74: #{dqn_forward.1} parent=63 // pred_check_branch
          %915 = sbr.rel (%p913) target = $region76
        $region75: #{dqn_forward.1} parent=63 // pred_region
          %s916 = smul.u32 4, %s24
        $region76: #{dqn_forward.1} parent=63 // pred_fallthru
          _
      $region64: #{dqn_forward.1} parent=5 // pred_fallthru
        _
      %p917 = scmp.le.s32.totalorder 2, %s19
      // Predicated region
      $region77: #{dqn_forward.1} parent=5 // pred_check
        %p918 = pneg %p917
      $region78: #{dqn_forward.1} parent=5 // pred_check_branch
        %920 = sbr.rel (%p918) target = $region80
      $region79: #{dqn_forward.1} parent=5 // pred_region
        %s921 = ssub.s32 %s19, 2
        // Predicated region
        $region81: #{dqn_forward.1} parent=79 // pred_check
          %p922 = pneg %p284
        $region82: #{dqn_forward.1} parent=79 // pred_check_branch
          %924 = sbr.rel (%p922) target = $region84
        $region83: #{dqn_forward.1} parent=79 // pred_region
          %s925 = smul.u32 4, %s25
          %p926 = scmp.lt.s32.totalorder %s925, 7
          %s927 = scalar_select %p926, %s925, 7
          %s928 = smul.addr %s927, 8
          %s929 = scalar_lea.vmem %s11, %s928
        $region84: #{dqn_forward.1} parent=79 // pred_fallthru
          _
      $region80: #{dqn_forward.1} parent=5 // pred_fallthru
        _
    $region6: #{dqn_forward.1} parent=1 // loop_footer
      %s23 = sadd.s32 1, %s19
    $region7: #{dqn_forward.1} parent=1 // loop_footer_branch
      %18 = sbr.rel target = $region3
    $region8: #{dqn_forward.1} parent=1 // loop_exit
      _
    %930 = vsyncpa [#allocation3], 1
    %s931 = scalar_lea.sflag [#allocation3], 1
    %932 = vsyncpa %s931, 1
    %933 = vsyncpa [#allocation5], 1

</llo_original>
